<compile_context>
chip_gen: v5e
topology: v5e:2x2
jax: 0.10.0
libtpu: 0.0.40
codegen_flags: <defaults>
</compile_context>

<pallas_src>
import jax
import jax.numpy as jnp
from jax import lax
from jax.experimental import pallas as pl
from jax.experimental.pallas import tpu as pltpu

LANES = 128
SUBLANES = 8
NUM_STEPS = 100        # MSEObserver.num
P_NORM = 2.4           # MSEObserver.p
EPS = 1e-8             # ObserverBase.eps
BIG_SCORE = 1e10       # reference best_score init
TINY = 1e-30           # clamp inside exp(1.2*log(d^2)); keeps log() finite, adds
                       # <= 1e-36 per exact-zero-error element (negligible)
CAND_BLOCK = 128       # candidates per grid block (one lane each)
ROW_TILE_MAX = 2048    # rows per streamed tile (1 MiB f32 block; ~4 MiB total VMEM)
SUB_ROWS = 64          # rows per register-resident elementwise chunk (8 vregs)


# ------------------------------ packing helpers ------------------------------

def _pad_flat(x):
    """Flatten any-shape tensor into a zero-padded lane-major (rows, 128) slab.

    The padding is confined to the LAST row tile by construction, so the
    min/max kernel only has to mask a single tile.
    """
    flat = jnp.asarray(x).reshape(-1).astype(jnp.float32)
    n = int(flat.shape[0])
    rows_data = -(-n // LANES)                         # rows holding real data
    rows_data = -(-rows_data // SUBLANES) * SUBLANES   # -> multiple of 8
    row_tile = min(ROW_TILE_MAX, rows_data)            # multiple of 8
    rows = -(-rows_data // row_tile) * row_tile        # pad < one tile of rows
    pad = rows * LANES - n
    xp = jnp.pad(flat, (0, pad)).reshape(rows, LANES)
    # TODO(synk): the padded copy could be avoided by masking the ragged tail
    # inside the kernels instead of materializing jnp.pad; kept for simplicity
    # (the search is compute-bound by ~2 orders of magnitude).
    return xp, n, row_tile


def _row_chunks(row_tile):
    """Static (offset, size) sub-slices of a row tile; each <= 8 vregs of f32."""
    chunks, off = [], 0
    while off < row_tile:
        size = min(SUB_ROWS, row_tile - off)
        chunks.append((off, size))
        off += size
    return tuple(chunks)


# ----------------------------- min / max kernel ------------------------------

def _make_minmax_kernel(row_tile, tail_valid):
    """Per-tile partial (8,128) min/max; mask applied only on the last tile."""

    def fold_min(v):
        return v.reshape(row_tile // SUBLANES, SUBLANES, LANES).min(axis=0)

    def fold_max(v):
        return v.reshape(row_tile // SUBLANES, SUBLANES, LANES).max(axis=0)

    def kernel(x_ref, min_ref, max_ref):
        rb = pl.program_id(0)
        last = pl.num_programs(0) - 1
        x = x_ref[...]

        @pl.when(rb != last)
        def _():
            # interior tiles are fully valid -> pure streaming, no mask
            min_ref[0] = fold_min(x)
            max_ref[0] = fold_max(x)

        @pl.when(rb == last)
        def _():
            # only the last tile contains zero padding; mask with a local iota
            # against a compile-time threshold
            row = lax.broadcasted_iota(jnp.int32, (row_tile, LANES), 0)
            lane = lax.broadcasted_iota(jnp.int32, (row_tile, LANES), 1)
            valid = row * LANES + lane < tail_valid
            min_ref[0] = fold_min(jnp.where(valid, x, jnp.inf))
            max_ref[0] = fold_max(jnp.where(valid, x, -jnp.inf))

    return kernel


def _pallas_minmax(xp, n_valid, row_tile):
    rows = xp.shape[0]
    n_tiles = rows // row_tile
    tail_valid = n_valid - (n_tiles - 1) * row_tile * LANES   # static python int
    mins, maxs = pl.pallas_call(
        _make_minmax_kernel(row_tile, tail_valid),
        out_shape=(jax.ShapeDtypeStruct((n_tiles, SUBLANES, LANES), jnp.float32),
                   jax.ShapeDtypeStruct((n_tiles, SUBLANES, LANES), jnp.float32)),
        grid=(n_tiles,),
        in_specs=[pl.BlockSpec((row_tile, LANES), lambda rb: (rb, 0))],
        out_specs=(pl.BlockSpec((1, SUBLANES, LANES), lambda rb: (rb, 0, 0)),
                   pl.BlockSpec((1, SUBLANES, LANES), lambda rb: (rb, 0, 0))),
        compiler_params=pltpu.CompilerParams(
            dimension_semantics=("parallel",)),   # both TCs on v7x
    )(xp)
    return jnp.min(mins), jnp.max(maxs)


# ----------------------------- MSE search kernel -----------------------------

def _make_search_kernel(*, mode, one_side, symmetric, quant_min, quant_max,
                        cand_block, cand_unroll, row_tile):
    qmin_f = float(quant_min)
    qmax_f = float(quant_max)
    qrange = float(quant_max - quant_min)
    n_zp = int(quant_max - quant_min + 1)
    half_p = P_NORM / 2.0
    chunks = _row_chunks(row_tile)

    shared_scale = (mode == "2d")
    if shared_scale:
        # precondition for hoisting t = x*inv_scale / round(t) out of the
        # candidate loop: every candidate in a block shares the same step index
        # ii (hence the same scale).
        assert n_zp % cand_block == 0
        assert not symmetric  # 2D search only runs for the asymmetric observer

    def fold8(v, size):
        # (size,128) -> (8,128) vreg-wise adds (VALU only, no XLU)
        return v.reshape(size // SUBLANES, SUBLANES, LANES).sum(axis=0)

    def kernel(xr_sm, x_ref, sum_ref, *scratch):
        cb = pl.program_id(0)                 # candidate block (parallel / megacore)
        rb = pl.program_id(1)                 # streamed row tile (reduction)
        xr = xr_sm[0]                         # xrange scalar from SMEM
        lane_ids = lax.broadcasted_iota(jnp.int32, (1, LANES), 1)
        zeros8 = jnp.zeros((SUBLANES, LANES), jnp.float32)
        zeros_lane = jnp.zeros((1, LANES), jnp.float32)

        if shared_scale:
            t_ref, r_ref = scratch
            # ---- block-constant scalars (same ii for every candidate here) ----
            base = cb * cand_block
            ii = (base // n_zp + 1).astype(jnp.float32)
            zp_base = (base % n_zp).astype(jnp.float32) + qmin_f
            tmp_max = xr / float(NUM_STEPS) * ii
            tmp_delta = tmp_max / qrange
            # (max_pos - min_neg) == tmp_max for every candidate in the block,
            # so the scale is block-constant.
            scale = jnp.maximum(tmp_delta, EPS)
            inv_scale = 1.0 / scale
            # scale**2.4 factored out of the per-element pow; applied once per
            # tile as a (1,128) vector multiply (no scalar transcendental).
            scale_pow = jnp.exp(P_NORM * jnp.log(jnp.full((1, LANES), scale,
                                                          jnp.float32)))
            # ---- per-grid-point prologue: hoist t = x*inv_scale, r = round(t) ----
            for off, size in chunks:
                t = x_ref[off:off + size, :] * inv_scale
                t_ref[off:off + size, :] = t
                r_ref[off:off + size, :] = jnp.round(t)

        def one_candidate(j, acc):
            if shared_scale:
                # per-candidate scalars only (zero_point and clip bounds)
                zp_i = zp_base + j.astype(jnp.float32)
                new_min = 0.0 - zp_i * tmp_delta
                min_neg = jnp.minimum(new_min, 0.0)
                zp = jnp.clip(qmin_f - jnp.round(min_neg / scale), qmin_f, qmax_f)
                lo = qmin_f - zp              # clip bounds in quantized units
                hi = qmax_f - zp
                acc8 = zeros8
                for off, size in chunks:      # static, register-sized chunks
                    t = t_ref[off:off + size, :]
                    r = r_ref[off:off + size, :]
                    d = jnp.clip(r, lo, hi) - t          # error / scale
                    e2 = d * d
                    # |d|^2.4 == exp(1.2*log(d^2)): 2 EUP pushes, no abs/select
                    powed = jnp.exp(half_p * jnp.log(jnp.maximum(e2, TINY)))
                    acc8 = acc8 + fold8(powed, size)     # defer cross-lane reduce
                s = jnp.sum(acc8)             # one XLU reduce per candidate/tile
            else:
                # 1D search: scale differs per candidate (not the hot path)
                idx = cb * cand_block + j
                ii_j = (idx + 1).astype(jnp.float32)
                thres = xr / float(NUM_STEPS) * ii_j
                new_min = jnp.float32(0.0) if one_side == "pos" else -thres
                new_max = jnp.float32(0.0) if one_side == "neg" else thres
                min_neg = jnp.minimum(new_min, 0.0)
                max_pos = jnp.maximum(new_max, 0.0)
                if symmetric:
                    max_pos = jnp.maximum(-min_neg, max_pos)
                    scale_j = jnp.maximum(max_pos / (qrange / 2.0), EPS)
                    zp = jnp.float32(0.0)
                else:
                    scale_j = jnp.maximum((max_pos - min_neg) / qrange, EPS)
                    zp = jnp.clip(qmin_f - jnp.round(min_neg / scale_j),
                                  qmin_f, qmax_f)
                inv_scale_j = 1.0 / scale_j
                lo = qmin_f - zp
                hi = qmax_f - zp
                acc8 = zeros8
                for off, size in chunks:
                    xs = x_ref[off:off + size, :]
                    t = xs * inv_scale_j
                    d = (jnp.clip(jnp.round(t), lo, hi) - t) * scale_j
                    e2 = d * d
                    powed = jnp.exp(half_p * jnp.log(jnp.maximum(e2, TINY)))
                    acc8 = acc8 + fold8(powed, size)
                s = jnp.sum(acc8)
            # scatter this candidate's partial sum into its own lane
            return acc + jnp.where(lane_ids == j, s, 0.0)

        def unrolled_body(c, acc):
            base_j = c * cand_unroll
            for u in range(cand_unroll):      # partial unroll (keeps EUP FIFO full)
                acc = one_candidate(base_j + u, acc)
            return acc

        tile_sums = lax.fori_loop(0, cand_block // cand_unroll, unrolled_body,
                                  zeros_lane)
        if shared_scale:
            tile_sums = tile_sums * scale_pow   # apply scale**2.4 once per tile

        # accumulate per-candidate sums across row tiles in the resident block
        @pl.when(rb == 0)
        def _():
            sum_ref[0] = tile_sums

        @pl.when(rb != 0)
        def _():
            sum_ref[0] = sum_ref[0] + tile_sums

    return kernel


def _candidate_bounds(idx, xrange, *, mode, one_side, quant_min, quant_max):
    """Recompute (new_min, new_max) for candidate `idx` (same math as the kernel)."""
    xrange = xrange.astype(jnp.float32)
    if mode == "2d":
        n_zp = quant_max - quant_min + 1
        ii = (idx // n_zp + 1).astype(jnp.float32)
        zp = (idx % n_zp).astype(jnp.float32) + float(quant_min)
        tmp_max = xrange / float(NUM_STEPS) * ii
        tmp_delta = tmp_max / float(quant_max - quant_min)
        new_min = 0.0 - zp * tmp_delta
        new_max = tmp_max - zp * tmp_delta
    else:
        ii = (idx + 1).astype(jnp.float32)
        thres = xrange / float(NUM_STEPS) * ii
        zero = jnp.float32(0.0)
        new_min = zero if one_side == "pos" else -thres
        new_max = zero if one_side == "neg" else thres
    return new_min, new_max


def _pallas_mse_search(xp, n_valid, row_tile, x_min, x_max, *, mode, one_side,
                       symmetric, quant_min, quant_max):
    rows = xp.shape[0]
    n_row_tiles = rows // row_tile
    n_zp = quant_max - quant_min + 1
    if mode == "2d":
        n_cand = NUM_STEPS * n_zp
        xrange = (x_max - x_min).astype(jnp.float32)
        # keep the "whole block shares ii" invariant (scale-hoist precondition)
        cand_block = CAND_BLOCK if n_zp % CAND_BLOCK == 0 else n_zp
    else:
        n_cand = NUM_STEPS
        xrange = jnp.maximum(jnp.abs(x_min), x_max).astype(jnp.float32)
        # >= 2 candidate blocks so both v7x TensorCores get work in 1D mode
        cand_block = -(-n_cand // 2)

    cand_unroll = 4 if cand_block % 4 == 0 else (2 if cand_block % 2 == 0 else 1)
    n_cblocks = pl.cdiv(n_cand, cand_block)

    kernel = _make_search_kernel(mode=mode, one_side=one_side,
                                 symmetric=symmetric, quant_min=quant_min,
                                 quant_max=quant_max, cand_block=cand_block,
                                 cand_unroll=cand_unroll, row_tile=row_tile)

    # t/r hoist buffers are only needed when the scale is block-constant (2D)
    scratch = ([pltpu.VMEM((row_tile, LANES), jnp.float32)] * 2
               if mode == "2d" else [])

    sums = pl.pallas_call(
        kernel,
        out_shape=jax.ShapeDtypeStruct((n_cblocks, 1, LANES), jnp.float32),
        grid=(n_cblocks, n_row_tiles),
        in_specs=[
            pl.BlockSpec(memory_space=pltpu.MemorySpace.SMEM),         # xrange
            pl.BlockSpec((row_tile, LANES), lambda cb, rb: (rb, 0)),   # rows
        ],
        out_specs=pl.BlockSpec((1, 1, LANES), lambda cb, rb: (cb, 0, 0)),
        scratch_shapes=scratch,
        compiler_params=pltpu.CompilerParams(
            dimension_semantics=("parallel", "arbitrary")),  # megacore candidates
    )(xrange.reshape(1), xp)

    # candidate-ordered scores; first-occurrence argmin == torch strict '<'
    scores = sums[:, 0, :cand_block].reshape(-1)[:n_cand] * (1.0 / float(n_valid))
    # torch's strict '<' loop never accepts a NaN score; guard argmin likewise
    scores = jnp.where(jnp.isnan(scores), jnp.inf, scores)
    best_idx = jnp.argmin(scores)
    best_score = scores[best_idx]
    new_min, new_max = _candidate_bounds(best_idx, xrange, mode=mode,
                                         one_side=one_side, quant_min=quant_min,
                                         quant_max=quant_max)
    accept = best_score < BIG_SCORE          # reference best_score init == 1e10
    best_min = jnp.where(accept, new_min, x_min)
    best_max = jnp.where(accept, new_max, x_max)
    return best_min, best_max


# ------------------------------- observer class ------------------------------

class EMAMSEObserverPallas:
    """JAX/Pallas port of EMAMSEObserver (per-tensor statistics, ch_axis=-1)."""

    def __init__(self, bit=8, symmetric=False, ch_axis=-1, ema_ratio=0.9):
        # TODO(synk): per-channel (ch_axis != -1) search path not implemented.
        assert ch_axis == -1, "only per-tensor (ch_axis=-1) is implemented"
        self.bit = bit
        self.symmetric = symmetric
        self.ch_axis = ch_axis
        self.ema_ratio = ema_ratio
        if symmetric:
            self.quant_min = -2 ** (bit - 1)
            self.quant_max = 2 ** (bit - 1) - 1
        else:
            self.quant_min = 0
            self.quant_max = 2 ** bit - 1
        self.min_val = jnp.array(jnp.inf, jnp.float32)
        self.max_val = jnp.array(-jnp.inf, jnp.float32)
        self.one_side_dist = None

    def __call__(self, x_orig):
        if x_orig.size == 0:
            return x_orig
        xp, n, row_tile = _pad_flat(x_orig)
        x_min, x_max = _pallas_minmax(xp, n, row_tile)

        if self.one_side_dist is None:
            self.one_side_dist = ('pos' if float(x_min) >= 0.0
                                  else 'neg' if float(x_max) <= 0.0 else 'no')

        mode = "1d" if (self.one_side_dist != 'no' or self.symmetric) else "2d"

        best_min, best_max = _pallas_mse_search(
            xp, n, row_tile, x_min, x_max,
            mode=mode, one_side=self.one_side_dist, symmetric=self.symmetric,
            quant_min=self.quant_min, quant_max=self.quant_max)

        # MSEObserver.forward buffer update
        self.min_val = jnp.minimum(self.min_val, best_min)
        self.max_val = jnp.maximum(self.max_val, best_max)
        # EMAMSEObserver.forward calls update_ema(self.min_val, self.max_val), i.e.
        # it blends the (already merged) buffer with itself -- an algebraic no-op
        # in the reference as well; reproduced verbatim for fidelity.
        r = jnp.float32(self.ema_ratio)
        self.min_val = self.min_val * r + self.min_val * (jnp.float32(1.0) - r)
        self.max_val = self.max_val * r + self.max_val * (jnp.float32(1.0) - r)
        return None  # matches torch forward (state-updating observer)


if __name__ == "__main__":
    key = jax.random.PRNGKey(0)
    x = jax.random.normal(key, (2, 4, 16, 16), dtype=jnp.float32)  # NCHW-like

    obs = EMAMSEObserverPallas(bit=8, symmetric=False, ch_axis=-1, ema_ratio=0.9)
    obs(x)
    jax.block_until_ready((obs.min_val, obs.max_val))
    print("KERNEL_OK")
</pallas_src>

<mosaic_0001>
module attributes {stable_mosaic.version = 11 : i64} {
  func.func @kernel(%arg0: i32, %arg1: memref<16x128xf32, #tpu.memory_space<vmem>>, %arg2: memref<1x8x128xf32, #tpu.memory_space<vmem>>, %arg3: memref<1x8x128xf32, #tpu.memory_space<vmem>>) attributes {dimension_semantics = [#tpu.dimension_semantics<parallel>], iteration_bounds = array<i64: 1>, scalar_prefetch = 0 : i64, scratch_operands = 0 : i64, tpu.core_type = #tpu.core_type<tc>, window_params = [{transform_indices = @transform_0, window_bounds = array<i64: 16, 128>}, {transform_indices = @transform_1, window_bounds = array<i64: 1, 8, 128>}, {transform_indices = @transform_2, window_bounds = array<i64: 1, 8, 128>}]} {
    %c0 = arith.constant 0 : index
    %c0_0 = arith.constant 0 : index
    %0 = vector.load %arg1[%c0, %c0_0] : memref<16x128xf32, #tpu.memory_space<vmem>>, vector<16x128xf32>
    %c0_i32 = arith.constant 0 : i32
    %1 = arith.cmpi ne, %arg0, %c0_i32 : i32
    %2 = arith.extui %1 : i1 to i32
    %c0_i32_1 = arith.constant 0 : i32
    %3 = arith.cmpi ne, %2, %c0_i32_1 : i32
    scf.if %3 {
      %7 = vector.shape_cast %0 : vector<16x128xf32> to vector<2x8x128xf32>
      %cst = arith.constant dense<0x7F800000> : vector<8x128xf32>
      %8 = vector.multi_reduction <minimumf>, %7, %cst [0] : vector<2x8x128xf32> to vector<8x128xf32>
      %c0_4 = arith.constant 0 : index
      %c0_5 = arith.constant 0 : index
      %c0_6 = arith.constant 0 : index
      %9 = vector.load %arg2[%c0_4, %c0_5, %c0_6] : memref<1x8x128xf32, #tpu.memory_space<vmem>>, vector<1x8x128xf32>
      %10 = vector.shape_cast %9 : vector<1x8x128xf32> to vector<8x128xf32>
      %11 = vector.shape_cast %8 : vector<8x128xf32> to vector<1x8x128xf32>
      tpu.vector_store %arg2[%c0_4, %c0_5, %c0_6], %11 {strides = array<i32>} : memref<1x8x128xf32, #tpu.memory_space<vmem>>, vector<1x8x128xf32>,
      %12 = vector.shape_cast %0 : vector<16x128xf32> to vector<2x8x128xf32>
      %cst_7 = arith.constant dense<0xFF800000> : vector<8x128xf32>
      %13 = vector.multi_reduction <maximumf>, %12, %cst_7 [0] : vector<2x8x128xf32> to vector<8x128xf32>
      %c0_8 = arith.constant 0 : index
      %c0_9 = arith.constant 0 : index
      %c0_10 = arith.constant 0 : index
      %14 = vector.load %arg3[%c0_8, %c0_9, %c0_10] : memref<1x8x128xf32, #tpu.memory_space<vmem>>, vector<1x8x128xf32>
      %15 = vector.shape_cast %14 : vector<1x8x128xf32> to vector<8x128xf32>
      %16 = vector.shape_cast %13 : vector<8x128xf32> to vector<1x8x128xf32>
      tpu.vector_store %arg3[%c0_8, %c0_9, %c0_10], %16 {strides = array<i32>} : memref<1x8x128xf32, #tpu.memory_space<vmem>>, vector<1x8x128xf32>,
    } else {
    }
    %c0_i32_2 = arith.constant 0 : i32
    %4 = arith.cmpi eq, %arg0, %c0_i32_2 : i32
    %5 = arith.extui %4 : i1 to i32
    %c0_i32_3 = arith.constant 0 : i32
    %6 = arith.cmpi ne, %5, %c0_i32_3 : i32
    scf.if %6 {
      %7 = tpu.iota {dimensions = array<i32: 0>} : vector<16x128xi32>
      %8 = tpu.iota {dimensions = array<i32: 1>} : vector<16x128xi32>
      %c128_i32 = arith.constant 128 : i32
      %9 = vector.broadcast %c128_i32 : i32 to vector<16x128xi32>
      %10 = arith.muli %7, %9 : vector<16x128xi32>
      %11 = arith.addi %10, %8 : vector<16x128xi32>
      %c2048_i32 = arith.constant 2048 : i32
      %12 = vector.broadcast %c2048_i32 : i32 to vector<16x128xi32>
      %13 = arith.cmpi slt, %11, %12 : vector<16x128xi32>
      %cst = arith.constant 0x7F800000 : f32
      %14 = vector.broadcast %cst : f32 to vector<16x128xf32>
      %15 = arith.select %13, %0, %14 : vector<16x128xi1>, vector<16x128xf32>
      %16 = vector.shape_cast %15 : vector<16x128xf32> to vector<2x8x128xf32>
      %cst_4 = arith.constant dense<0x7F800000> : vector<8x128xf32>
      %17 = vector.multi_reduction <minimumf>, %16, %cst_4 [0] : vector<2x8x128xf32> to vector<8x128xf32>
      %c0_5 = arith.constant 0 : index
      %c0_6 = arith.constant 0 : index
      %c0_7 = arith.constant 0 : index
      %18 = vector.load %arg2[%c0_5, %c0_6, %c0_7] : memref<1x8x128xf32, #tpu.memory_space<vmem>>, vector<1x8x128xf32>
      %19 = vector.shape_cast %18 : vector<1x8x128xf32> to vector<8x128xf32>
      %20 = vector.shape_cast %17 : vector<8x128xf32> to vector<1x8x128xf32>
      tpu.vector_store %arg2[%c0_5, %c0_6, %c0_7], %20 {strides = array<i32>} : memref<1x8x128xf32, #tpu.memory_space<vmem>>, vector<1x8x128xf32>,
      %cst_8 = arith.constant 0xFF800000 : f32
      %21 = vector.broadcast %cst_8 : f32 to vector<16x128xf32>
      %22 = arith.select %13, %0, %21 : vector<16x128xi1>, vector<16x128xf32>
      %23 = vector.shape_cast %22 : vector<16x128xf32> to vector<2x8x128xf32>
      %cst_9 = arith.constant dense<0xFF800000> : vector<8x128xf32>
      %24 = vector.multi_reduction <maximumf>, %23, %cst_9 [0] : vector<2x8x128xf32> to vector<8x128xf32>
      %c0_10 = arith.constant 0 : index
      %c0_11 = arith.constant 0 : index
      %c0_12 = arith.constant 0 : index
      %25 = vector.load %arg3[%c0_10, %c0_11, %c0_12] : memref<1x8x128xf32, #tpu.memory_space<vmem>>, vector<1x8x128xf32>
      %26 = vector.shape_cast %25 : vector<1x8x128xf32> to vector<8x128xf32>
      %27 = vector.shape_cast %24 : vector<8x128xf32> to vector<1x8x128xf32>
      tpu.vector_store %arg3[%c0_10, %c0_11, %c0_12], %27 {strides = array<i32>} : memref<1x8x128xf32, #tpu.memory_space<vmem>>, vector<1x8x128xf32>,
    } else {
    }
    return
  }
  func.func @transform_0(%arg0: i32) -> (i32, i32) {
    %c0_i32 = arith.constant 0 : i32
    %c0_i32_0 = arith.constant 0 : i32
    return %arg0, %c0_i32 : i32, i32
  }
  func.func @transform_1(%arg0: i32) -> (i32, i32, i32) {
    %c0_i32 = arith.constant 0 : i32
    %c0_i32_0 = arith.constant 0 : i32
    %c0_i32_1 = arith.constant 0 : i32
    return %arg0, %c0_i32, %c0_i32_0 : i32, i32, i32
  }
  func.func @transform_2(%arg0: i32) -> (i32, i32, i32) {
    %c0_i32 = arith.constant 0 : i32
    %c0_i32_0 = arith.constant 0 : i32
    %c0_i32_1 = arith.constant 0 : i32
    return %arg0, %c0_i32, %c0_i32_0 : i32, i32, i32
  }
}

</mosaic_0001>

<llo_original>
// kernel: tpu_custom_call.1
$region0: #{tpu_custom_call.1}
  #allocation0 [shape = 'u32[]', space=smem, size = 0x4, offset = 0x4, fixed_abs, tag = 'smem constant byte address 0x4 - core index']
  #allocation1 [shape = 'u32[72,128]{1,0:T(1,128)}', space=vmem, size = 0x9000, scoped, tag = 'internal scratch']
  %s0 = inlined_call_operand.hbm [shape: f32[16,128], index: 0, kind: input, shape index: {}]
  %s1 = inlined_call_operand.hbm [shape: f32[1,8,128], index: 1, kind: output, shape index: {0}]
  %s2 = inlined_call_operand.hbm [shape: f32[1,8,128], index: 2, kind: output, shape index: {1}]
  %3 = xla_tuple %s1, %s2
  %s4 = sld [smem:[#allocation0]]
  $region34: #{tpu_custom_call.1} parent=0
    _
  %s6 = ssub.s32 1, %s4
  %s7 = scalar_select 0, %s6, %s4
  $region1: #{tpu_custom_call.1} parent=0
    #allocation2 [shape = 'u8[8192]{0}', space=vmem, size = 0x2000, scoped, tag = 'input window, operand 0, single buffered']
    #allocation3 [shape = 's32[1]{0}', space=sflag, size = 0x4, scoped, tag = 'scoped memory for tpu_custom_call.1']
    #allocation4 [shape = 's32[1]{0}', space=sflag, size = 0x4, scoped, tag = 'scoped memory for tpu_custom_call.1']
    #allocation5 [shape = 'u8[4096]{0}', space=vmem, size = 0x1000, scoped, tag = 'output window, operand 0, single buffered']
    #allocation6 [shape = 'u8[4096]{0}', space=vmem, size = 0x1000, scoped, tag = 'output window, operand 1, single buffered']
    #allocation7 [shape = 's32[1]{0}', space=sflag, size = 0x4, scoped, tag = 'scoped memory for tpu_custom_call.1']
    %8 = vsyncpa [#allocation3], 0
    %9 = vsyncpa [#allocation4], 0
    %10 = vsyncpa [#allocation7], 0
    // Predicated region
    $region2: #{tpu_custom_call.1} parent=1 // pred_check
      _
    $region3: #{tpu_custom_call.1} parent=1 // pred_check_branch
      %12 = sbr.rel (0) target = $region5
    $region4: #{tpu_custom_call.1} parent=1 // pred_region
      %14 = vsyncadd [#allocation3], 0
      %s15 = sshll.u32 %s0, 4
      %s16 = int_to_ptr.hbm [resolvable:$true] %s15
      %s17 = sshll.u32 [#allocation2], 4
      %s18 = int_to_ptr.vmem [resolvable:$true] %s17
      %23 = dma.hbm_to_vmem [thread:$0]  %s16, 256, %s18, [#allocation3], 128, 128, 8
    $region5: #{tpu_custom_call.1} parent=1 // pred_fallthru
      _
    // Predicated region
    $region6: #{tpu_custom_call.1} parent=1 // pred_check
      _
    $region7: #{tpu_custom_call.1} parent=1 // pred_check_branch
      %25 = sbr.rel (0) target = $region9
    $region8: #{tpu_custom_call.1} parent=1 // pred_region
      %27 = dma.done [#allocation3], 256
    $region9: #{tpu_custom_call.1} parent=1 // pred_fallthru
      _
    %v28 = vld [vmem:[#allocation2] sm:$0xff]
    %v29 = vld [vmem:[#allocation2 + $0x8] sm:$0xff]
    %p30 = scmp.ne.s32.totalorder 0, 0
    // Predicated region
    $region10: #{tpu_custom_call.1} parent=1 // pred_check
      %p31 = pneg %p30
    $region11: #{tpu_custom_call.1} parent=1 // pred_check_branch
      %33 = sbr.rel (%p31) target = $region13
    $region12: #{tpu_custom_call.1} parent=1 // pred_region
      %v34 = vmin.f32 %v28, %v29
      %35 = vst [vmem:[#allocation5] sm:$0xff] %v34
      %v36 = vmax.f32 %v28, %v29
      %37 = vst [vmem:[#allocation6] sm:$0xff] %v36
    $region13: #{tpu_custom_call.1} parent=1 // pred_fallthru
      _
    %p38 = scmp.eq.s32.totalorder 0, 0
    // Predicated region
    $region14: #{tpu_custom_call.1} parent=1 // pred_check
      %p39 = pneg %p38
    $region15: #{tpu_custom_call.1} parent=1 // pred_check_branch
      %41 = sbr.rel (%p39) target = $region17
    $region16: #{tpu_custom_call.1} parent=1 // pred_region
      %v42 = vlaneseq
      %v43 = vshrl.u32 %v42, 7
      %v44 = vadd.s32 %v43, 8
      %v45 = vlaneseq
      %v46 = vand.u32 %v45, 127
      %v47 = vmul.u32 %v43, 128
      %v48 = vmul.u32 %v44, 128
      %v49 = vadd.s32 %v47, %v46
      %v50 = vadd.s32 %v48, %v46
      %vm51 = vcmp.lt.s32.totalorder %v49, 2048
      %vm52 = vcmp.lt.s32.totalorder %v50, 2048
      %v53 = vsel %vm51, %v28, inf
      %v54 = vsel %vm52, %v29, inf
      %v55 = vmin.f32 %v53, %v54
      %56 = vst [vmem:[#allocation5] sm:$0xff] %v55
      %v57 = vsel %vm51, %v28, -inf
      %v58 = vsel %vm52, %v29, -inf
      %v59 = vmax.f32 %v57, %v58
      %60 = vst [vmem:[#allocation6] sm:$0xff] %v59
    $region17: #{tpu_custom_call.1} parent=1 // pred_fallthru
      _
    // Predicated region
    $region18: #{tpu_custom_call.1} parent=1 // pred_check
      _
    $region19: #{tpu_custom_call.1} parent=1 // pred_check_branch
      %62 = sbr.rel (0) target = $region21
    $region20: #{tpu_custom_call.1} parent=1 // pred_region
      %64 = vsyncadd [#allocation4], 0
      %s66 = sshll.u32 [#allocation5], 4
      %s67 = int_to_ptr.vmem [resolvable:$true] %s66
      %s68 = sshll.u32 %s1, 4
      %s69 = int_to_ptr.hbm [resolvable:$true] %s68
      %71 = dma.vmem_to_hbm [thread:$0]  %s67, 128, %s69, [#allocation4]
    $region21: #{tpu_custom_call.1} parent=1 // pred_fallthru
      _
    // Predicated region
    $region22: #{tpu_custom_call.1} parent=1 // pred_check
      _
    $region23: #{tpu_custom_call.1} parent=1 // pred_check_branch
      %73 = sbr.rel (0) target = $region25
    $region24: #{tpu_custom_call.1} parent=1 // pred_region
      %75 = vsyncadd [#allocation7], 0
      %s77 = sshll.u32 [#allocation6], 4
      %s78 = int_to_ptr.vmem [resolvable:$true] %s77
      %s79 = sshll.u32 %s2, 4
      %s80 = int_to_ptr.hbm [resolvable:$true] %s79
      %82 = dma.vmem_to_hbm [thread:$0]  %s78, 128, %s80, [#allocation7]
    $region25: #{tpu_custom_call.1} parent=1 // pred_fallthru
      _
    // Predicated region
    $region26: #{tpu_custom_call.1} parent=1 // pred_check
      _
    $region27: #{tpu_custom_call.1} parent=1 // pred_check_branch
      %84 = sbr.rel (0) target = $region29
    $region28: #{tpu_custom_call.1} parent=1 // pred_region
      %86 = dma.done [#allocation4], 128
    $region29: #{tpu_custom_call.1} parent=1 // pred_fallthru
      _
    // Predicated region
    $region30: #{tpu_custom_call.1} parent=1 // pred_check
      _
    $region31: #{tpu_custom_call.1} parent=1 // pred_check_branch
      %88 = sbr.rel (0) target = $region33
    $region32: #{tpu_custom_call.1} parent=1 // pred_region
      %90 = dma.done [#allocation7], 128
    $region33: #{tpu_custom_call.1} parent=1 // pred_fallthru
      _
    %91 = vsyncpa [#allocation3], 1
    %92 = vsyncpa [#allocation4], 1
    %93 = vsyncpa [#allocation7], 1

</llo_original>
